<compile_context>
chip_gen: v6e
topology: v6e:2x2x1
jax: 0.10.0
libtpu: 0.0.40
codegen_flags: <defaults>
</compile_context>

<pallas_src>
import functools
import math

import jax
import jax.numpy as jnp
from jax import lax
from jax.experimental import pallas as pl
from jax.experimental.pallas import tpu as pltpu

NUM_RESTYPES_WITH_X_AND_GAP = 22  # len(residue_constants.restypes_with_x_and_gap)
LN_EPS = 1e-5                     # torch.nn.LayerNorm default eps
_INV_SQRT2 = 1.0 / math.sqrt(2.0)


def _round_up(x, n):
  return ((x + n - 1) // n) * n


def _seq_profile_head_kernel(x_ref, w1_ref, b1_ref, w2_ref, b2_ref, o_ref):
  # x_ref: (bm, Din)    w1_ref: (Din, D)   b1_ref: (1, D)  [f32]
  # w2_ref: (D, Cp)     b2_ref: (1, Cp)    o_ref: (bm, Cp)
  # Cast rows to the MXU operand dtype (no-op when x is already bf16).
  xb = x_ref[...].astype(w1_ref.dtype)

  # Linear 1 (MXU, f32 accumulation).
  h = jnp.dot(xb, w1_ref[...], preferred_element_type=jnp.float32) + b1_ref[...]

  # GELU (exact / erf variant, matching nn.GELU() default numerics).
  # TODO(synk): tanh-approx GELU would move work from VALU to the EUP slot.
  h = 0.5 * h * (1.0 + lax.erf(h * _INV_SQRT2))

  # One-pass LayerNorm over last dim (biased variance, eps=1e-5).  Affine
  # params were folded into w2/b2 in the wrapper, so only normalization here.
  inv_d = 1.0 / h.shape[-1]
  s1 = jnp.sum(h, axis=-1, keepdims=True)
  s2 = jnp.sum(h * h, axis=-1, keepdims=True)
  mean = s1 * inv_d
  var = jnp.maximum(s2 * inv_d - mean * mean, 0.0)
  r = lax.rsqrt(var + LN_EPS)
  # Fused normalize + cast to the MXU operand dtype.
  hn = (h * r - mean * r).astype(w2_ref.dtype)

  # Linear 2 (lane-padded output; LN affine already folded into w2/b2).
  logits = jnp.dot(hn, w2_ref[...], preferred_element_type=jnp.float32) + b2_ref[...]
  o_ref[...] = logits.astype(o_ref.dtype)


@functools.partial(
    jax.jit,
    static_argnames=("block_m", "single_buffer_weights", "vmem_budget_bytes"))
def sequence_profile_head(x, params, *, block_m=512, single_buffer_weights=True,
                          vmem_budget_bytes=44 * 1024 * 1024):
  """Forward pass of SequenceProfileHead.

  Args:
    x: (batch, seq, input_dim) single representation (channel-last).
    params: dict with w1 (input_dim, dim), b1 (dim,), ln_g (dim,), ln_b (dim,),
            w2 (dim, n_restypes), b2 (n_restypes,).
  Returns:
    logits: (batch, seq, n_restypes)
  """
  b, n, d_in = x.shape
  d = params["w1"].shape[1]
  c = params["w2"].shape[1]

  m = b * n
  # No row padding: the trailing partial row block is handled by Pallas
  # (out-of-bounds output rows are discarded; rows are independent).
  x2 = x.reshape(m, d_in)

  # Lane-dense output: pad the class dimension to a multiple of 128.
  cp = _round_up(c, 128)

  # MXU operands in bf16 even for f32 inputs (f32 matmul is multi-pass and
  # doubles weight bytes); biases and accumulation stay f32.
  mxu_dtype = jnp.bfloat16 if x.dtype == jnp.float32 else x.dtype

  # One-time param prep (trace time): fold LN affine into the second linear,
  # pad w2/b2 columns with zeros, cast weights to the MXU operand dtype and
  # biases to f32.  No per-grid-step casts of weights inside the kernel.
  w1 = params["w1"].astype(mxu_dtype)
  b1 = params["b1"].astype(jnp.float32).reshape(1, d)

  g = params["ln_g"].astype(jnp.float32)
  beta = params["ln_b"].astype(jnp.float32)
  w2_f32 = params["w2"].astype(jnp.float32)
  b2_f32 = params["b2"].astype(jnp.float32)
  w2_fold = g[:, None] * w2_f32                      # (D, C)
  b2_fold = beta @ w2_f32 + b2_f32                   # (C,)
  w2_fold = jnp.pad(w2_fold, ((0, 0), (0, cp - c))).astype(mxu_dtype)
  b2_fold = jnp.pad(b2_fold, ((0, cp - c),)).reshape(1, cp)

  x_sz = jnp.dtype(x.dtype).itemsize
  w_sz = jnp.dtype(mxu_dtype).itemsize
  out_sz = jnp.dtype(x.dtype).itemsize
  weight_bufs = 1 if single_buffer_weights else 2

  def vmem_estimate(bm_):
    x_bytes = 2 * bm_ * d_in * x_sz                 # double-buffered input rows
    out_bytes = 2 * bm_ * cp * out_sz               # double-buffered output rows
    w_bytes = weight_bufs * (d_in * d * w_sz + d * 4 + d * cp * w_sz + cp * 4)
    tmp_bytes = 4 * bm_ * d * 4 + 2 * bm_ * cp * 4  # live f32 intermediates
    return x_bytes + out_bytes + w_bytes + tmp_bytes

  # Row tile: multiple of 8, no larger than needed; keep >=2 grid steps when
  # possible so ("parallel",) can shard across v7x's 2 TensorCores; shrink
  # until the VMEM estimate fits the per-core budget (v7x has 64 MiB physical).
  bm = max(8, _round_up(min(block_m, m), 8))
  if m > 8:
    bm = min(bm, max(8, _round_up(pl.cdiv(m, 2), 8)))
  while bm > 8 and vmem_estimate(bm) > vmem_budget_bytes:
    bm = max(8, _round_up(bm // 2, 8))

  grid = (pl.cdiv(m, bm),)
  full = lambda i: (0, 0)

  # Constant-index blocks (weights/biases) don't need double buffering.
  if single_buffer_weights:
    def w_spec(shape):
      return pl.BlockSpec(shape, full, pipeline_mode=pl.Buffered(1))
  else:
    def w_spec(shape):
      return pl.BlockSpec(shape, full)

  # Explicit scoped-VMEM limit (v5e default is only ~16 MiB), with headroom,
  # capped at v7x's 64 MiB physical VMEM.
  vmem_limit = int(min(64 * 1024 * 1024,
                       max(32 * 1024 * 1024,
                           1.25 * vmem_estimate(bm) + (2 << 20))))

  out = pl.pallas_call(
      _seq_profile_head_kernel,
      out_shape=jax.ShapeDtypeStruct((m, cp), x.dtype),
      grid_spec=pltpu.PrefetchScalarGridSpec(
          num_scalar_prefetch=0,
          grid=grid,
          in_specs=[
              pl.BlockSpec((bm, d_in), lambda i: (i, 0)),   # x rows (pipelined)
              w_spec((d_in, d)),                            # w1 (resident)
              w_spec((1, d)),                               # b1
              w_spec((d, cp)),                              # w2 (folded, padded)
              w_spec((1, cp)),                              # b2 (folded, padded)
          ],
          out_specs=pl.BlockSpec((bm, cp), lambda i: (i, 0)),
      ),
      compiler_params=pltpu.CompilerParams(
          dimension_semantics=("parallel",),
          vmem_limit_bytes=vmem_limit),
  )(x2, w1, b1, w2_fold, b2_fold)

  # Strip only the lane padding of the class dimension (no row padding was
  # added).  Kept for API fidelity; downstream code that can mask could
  # consume the padded 128-wide slab directly and skip this relayout.
  return out[:, :c].reshape(b, n, c)


def _make_params(key, input_dim, dim, n_out, dtype=jnp.float32):
  """Deterministic parameter init (shapes mirror the nn.Sequential in __init__)."""
  k1, k2, k3, k4 = jax.random.split(key, 4)
  # nn.Linear weights are stored (out, in) in torch; we keep (in, out) for x @ W.
  bound1 = 1.0 / math.sqrt(input_dim)
  bound2 = 1.0 / math.sqrt(dim)
  return {
      "w1": jax.random.uniform(k1, (input_dim, dim), dtype, -bound1, bound1),
      "b1": jax.random.uniform(k2, (dim,), dtype, -bound1, bound1),
      "ln_g": jnp.ones((dim,), dtype),
      "ln_b": jnp.zeros((dim,), dtype),
      "w2": jax.random.uniform(k3, (dim, n_out), dtype, -bound2, bound2),
      "b2": jax.random.uniform(k4, (n_out,), dtype, -bound2, bound2),
  }


def _reference(x, p):
  """Pure-JAX f32 reference of the module forward pass (unfolded LN affine)."""
  h = x @ p["w1"] + p["b1"]
  h = 0.5 * h * (1.0 + lax.erf(h / math.sqrt(2.0)))
  mean = jnp.mean(h, axis=-1, keepdims=True)
  var = jnp.mean((h - mean) ** 2, axis=-1, keepdims=True)
  h = (h - mean) * lax.rsqrt(var + LN_EPS) * p["ln_g"] + p["ln_b"]
  return h @ p["w2"] + p["b2"]


def _reference_bf16(x, p):
  """Reference emulating the kernel's bf16 MXU operands / f32 accumulation."""
  h = jnp.dot(x.astype(jnp.bfloat16), p["w1"].astype(jnp.bfloat16),
              preferred_element_type=jnp.float32) + p["b1"]
  h = 0.5 * h * (1.0 + lax.erf(h / math.sqrt(2.0)))
  mean = jnp.mean(h, axis=-1, keepdims=True)
  var = jnp.mean((h - mean) ** 2, axis=-1, keepdims=True)
  hn = (h - mean) * lax.rsqrt(var + LN_EPS) * p["ln_g"] + p["ln_b"]
  return jnp.dot(hn.astype(jnp.bfloat16), p["w2"].astype(jnp.bfloat16),
                 preferred_element_type=jnp.float32) + p["b2"]


if __name__ == "__main__":
  key = jax.random.PRNGKey(0)
  kx, kp = jax.random.split(key)

  batch, seq, input_dim, dim = 2, 8, 32, 32
  x = jax.random.normal(kx, (batch, seq, input_dim), jnp.float32)
  params = _make_params(kp, input_dim, dim, NUM_RESTYPES_WITH_X_AND_GAP)

  try:
    logits = sequence_profile_head(x, params)
    jax.block_until_ready(logits)
  except Exception:
    # Fallback for JAX versions without BlockSpec pipeline_mode support.
    logits = sequence_profile_head(x, params, single_buffer_weights=False)
    jax.block_until_ready(logits)

  assert logits.shape == (batch, seq, NUM_RESTYPES_WITH_X_AND_GAP)

  # Tight check against a reference using the same bf16-operand discipline.
  ref_bf16 = _reference_bf16(x, params)
  assert jnp.allclose(logits, ref_bf16, atol=1e-2, rtol=1e-2)

  # Looser check against the pure-f32 module semantics (bf16 MXU operands
  # introduce ~1e-2-level differences at these magnitudes).
  ref = _reference(x, params)
  assert jnp.allclose(logits, ref, atol=5e-2, rtol=5e-2)

  print("KERNEL_OK")
</pallas_src>

<mosaic_0001>
module attributes {stable_mosaic.version = 11 : i64} {
  func.func @_seq_profile_head_kernel(%arg0: i32, %arg1: memref<8x32xf32, #tpu.memory_space<vmem>>, %arg2: memref<32x32xbf16, #tpu.memory_space<vmem>>, %arg3: memref<1x32xf32, #tpu.memory_space<vmem>>, %arg4: memref<32x128xbf16, #tpu.memory_space<vmem>>, %arg5: memref<1x128xf32, #tpu.memory_space<vmem>>, %arg6: memref<8x128xf32, #tpu.memory_space<vmem>>) attributes {dimension_semantics = [#tpu.dimension_semantics<parallel>], iteration_bounds = array<i64: 2>, scalar_prefetch = 0 : i64, scratch_operands = 0 : i64, tpu.core_type = #tpu.core_type<tc>, window_params = [{transform_indices = @transform_0, window_bounds = array<i64: 8, 32>}, {pipeline_mode = #tpu.pipeline_mode<synchronous>, transform_indices = @transform_1, window_bounds = array<i64: 32, 32>}, {pipeline_mode = #tpu.pipeline_mode<synchronous>, transform_indices = @transform_2, window_bounds = array<i64: 1, 32>}, {pipeline_mode = #tpu.pipeline_mode<synchronous>, transform_indices = @transform_3, window_bounds = array<i64: 32, 128>}, {pipeline_mode = #tpu.pipeline_mode<synchronous>, transform_indices = @transform_4, window_bounds = array<i64: 1, 128>}, {transform_indices = @transform_5, window_bounds = array<i64: 8, 128>}]} {
    %c0 = arith.constant 0 : index
    %c0_0 = arith.constant 0 : index
    %0 = vector.load %arg1[%c0, %c0_0] : memref<8x32xf32, #tpu.memory_space<vmem>>, vector<8x32xf32>
    %1 = arith.truncf %0 : vector<8x32xf32> to vector<8x32xbf16>
    %c0_1 = arith.constant 0 : index
    %c0_2 = arith.constant 0 : index
    %2 = vector.load %arg2[%c0_1, %c0_2] : memref<32x32xbf16, #tpu.memory_space<vmem>>, vector<32x32xbf16>
    %cst = arith.constant dense<0.000000e+00> : vector<8x32xf32>
    %3 = tpu.matmul %1, %2, %cst {dimension_numbers = #tpu.dot_dimension_numbers<[1], [0], [0], [1], [0, 0, 1, 1], [], []>} : vector<8x32xbf16>, vector<32x32xbf16>, vector<8x32xf32> -> vector<8x32xf32>
    %c0_3 = arith.constant 0 : index
    %c0_4 = arith.constant 0 : index
    %4 = vector.load %arg3[%c0_3, %c0_4] : memref<1x32xf32, #tpu.memory_space<vmem>>, vector<1x32xf32>
    %5 = vector.broadcast %4 : vector<1x32xf32> to vector<8x32xf32>
    %6 = arith.addf %3, %5 : vector<8x32xf32>
    %cst_5 = arith.constant 5.000000e-01 : f32
    %7 = vector.broadcast %cst_5 : f32 to vector<8x32xf32>
    %8 = arith.mulf %7, %6 : vector<8x32xf32>
    %cst_6 = arith.constant 0.707106769 : f32
    %9 = vector.broadcast %cst_6 : f32 to vector<8x32xf32>
    %10 = arith.mulf %6, %9 : vector<8x32xf32>
    %11 = math.erf %10 : vector<8x32xf32>
    %cst_7 = arith.constant 1.000000e+00 : f32
    %12 = vector.broadcast %cst_7 : f32 to vector<8x32xf32>
    %13 = arith.addf %12, %11 : vector<8x32xf32>
    %14 = arith.mulf %8, %13 : vector<8x32xf32>
    %cst_8 = arith.constant dense<0.000000e+00> : vector<8xf32>
    %15 = vector.multi_reduction <add>, %14, %cst_8 [1] : vector<8x32xf32> to vector<8xf32>
    %16 = vector.shape_cast %15 : vector<8xf32> to vector<8x1xf32>
    %17 = arith.mulf %14, %14 : vector<8x32xf32>
    %cst_9 = arith.constant dense<0.000000e+00> : vector<8xf32>
    %18 = vector.multi_reduction <add>, %17, %cst_9 [1] : vector<8x32xf32> to vector<8xf32>
    %19 = vector.shape_cast %18 : vector<8xf32> to vector<8x1xf32>
    %cst_10 = arith.constant 3.125000e-02 : f32
    %20 = vector.broadcast %cst_10 : f32 to vector<8x1xf32>
    %21 = arith.mulf %16, %20 : vector<8x1xf32>
    %cst_11 = arith.constant 3.125000e-02 : f32
    %22 = vector.broadcast %cst_11 : f32 to vector<8x1xf32>
    %23 = arith.mulf %19, %22 : vector<8x1xf32>
    %24 = arith.mulf %21, %21 : vector<8x1xf32>
    %25 = arith.subf %23, %24 : vector<8x1xf32>
    %cst_12 = arith.constant 0.000000e+00 : f32
    %26 = vector.broadcast %cst_12 : f32 to vector<8x1xf32>
    %27 = arith.maximumf %25, %26 : vector<8x1xf32>
    %cst_13 = arith.constant 9.99999974E-6 : f32
    %28 = vector.broadcast %cst_13 : f32 to vector<8x1xf32>
    %29 = arith.addf %27, %28 : vector<8x1xf32>
    %30 = math.rsqrt %29 : vector<8x1xf32>
    %31 = vector.broadcast %30 : vector<8x1xf32> to vector<8x32xf32>
    %32 = arith.mulf %14, %31 : vector<8x32xf32>
    %33 = arith.mulf %21, %30 : vector<8x1xf32>
    %34 = vector.broadcast %33 : vector<8x1xf32> to vector<8x32xf32>
    %35 = arith.subf %32, %34 : vector<8x32xf32>
    %36 = arith.truncf %35 : vector<8x32xf32> to vector<8x32xbf16>
    %c0_14 = arith.constant 0 : index
    %c0_15 = arith.constant 0 : index
    %37 = vector.load %arg4[%c0_14, %c0_15] : memref<32x128xbf16, #tpu.memory_space<vmem>>, vector<32x128xbf16>
    %cst_16 = arith.constant dense<0.000000e+00> : vector<8x128xf32>
    %38 = tpu.matmul %36, %37, %cst_16 {dimension_numbers = #tpu.dot_dimension_numbers<[1], [0], [0], [1], [0, 0, 1, 1], [], []>} : vector<8x32xbf16>, vector<32x128xbf16>, vector<8x128xf32> -> vector<8x128xf32>
    %c0_17 = arith.constant 0 : index
    %c0_18 = arith.constant 0 : index
    %39 = vector.load %arg5[%c0_17, %c0_18] : memref<1x128xf32, #tpu.memory_space<vmem>>, vector<1x128xf32>
    %40 = vector.broadcast %39 : vector<1x128xf32> to vector<8x128xf32>
    %41 = arith.addf %38, %40 : vector<8x128xf32>
    %c0_19 = arith.constant 0 : index
    %c0_20 = arith.constant 0 : index
    %42 = vector.load %arg6[%c0_19, %c0_20] : memref<8x128xf32, #tpu.memory_space<vmem>>, vector<8x128xf32>
    tpu.vector_store %arg6[%c0_19, %c0_20], %41 {strides = array<i32>} : memref<8x128xf32, #tpu.memory_space<vmem>>, vector<8x128xf32>,
    return
  }
  func.func @transform_0(%arg0: i32) -> (i32, i32) {
    %c0_i32 = arith.constant 0 : i32
    %c0_i32_0 = arith.constant 0 : i32
    return %arg0, %c0_i32 : i32, i32
  }
  func.func @transform_1(%arg0: i32) -> (i32, i32) {
    %c0_i32 = arith.constant 0 : i32
    %c0_i32_0 = arith.constant 0 : i32
    %c0_i32_1 = arith.constant 0 : i32
    return %c0_i32, %c0_i32_0 : i32, i32
  }
  func.func @transform_2(%arg0: i32) -> (i32, i32) {
    %c0_i32 = arith.constant 0 : i32
    %c0_i32_0 = arith.constant 0 : i32
    %c0_i32_1 = arith.constant 0 : i32
    return %c0_i32, %c0_i32_0 : i32, i32
  }
  func.func @transform_3(%arg0: i32) -> (i32, i32) {
    %c0_i32 = arith.constant 0 : i32
    %c0_i32_0 = arith.constant 0 : i32
    %c0_i32_1 = arith.constant 0 : i32
    return %c0_i32, %c0_i32_0 : i32, i32
  }
  func.func @transform_4(%arg0: i32) -> (i32, i32) {
    %c0_i32 = arith.constant 0 : i32
    %c0_i32_0 = arith.constant 0 : i32
    %c0_i32_1 = arith.constant 0 : i32
    return %c0_i32, %c0_i32_0 : i32, i32
  }
  func.func @transform_5(%arg0: i32) -> (i32, i32) {
    %c0_i32 = arith.constant 0 : i32
    %c0_i32_0 = arith.constant 0 : i32
    return %arg0, %c0_i32 : i32, i32
  }
}

module attributes {stable_mosaic.version = 11 : i64} {
  func.func @_seq_profile_head_kernel(%arg0: i32, %arg1: memref<8x32xf32, #tpu.memory_space<vmem>>, %arg2: memref<32x32xbf16, #tpu.memory_space<vmem>>, %arg3: memref<1x32xf32, #tpu.memory_space<vmem>>, %arg4: memref<32x128xbf16, #tpu.memory_space<vmem>>, %arg5: memref<1x128xf32, #tpu.memory_space<vmem>>, %arg6: memref<8x128xf32, #tpu.memory_space<vmem>>) attributes {dimension_semantics = [#tpu.dimension_semantics<parallel>], iteration_bounds = array<i64: 2>, scalar_prefetch = 0 : i64, scratch_operands = 0 : i64, tpu.core_type = #tpu.core_type<tc>, window_params = [{transform_indices = @transform_0, window_bounds = array<i64: 8, 32>}, {pipeline_mode = #tpu.pipeline_mode<synchronous>, transform_indices = @transform_1, window_bounds = array<i64: 32, 32>}, {pipeline_mode = #tpu.pipeline_mode<synchronous>, transform_indices = @transform_2, window_bounds = array<i64: 1, 32>}, {pipeline_mode = #tpu.pipeline_mode<synchronous>, transform_indices = @transform_3, window_bounds = array<i64: 32, 128>}, {pipeline_mode = #tpu.pipeline_mode<synchronous>, transform_indices = @transform_4, window_bounds = array<i64: 1, 128>}, {transform_indices = @transform_5, window_bounds = array<i64: 8, 128>}]} {
    %c0 = arith.constant 0 : index
    %c0_0 = arith.constant 0 : index
    %0 = vector.load %arg1[%c0, %c0_0] : memref<8x32xf32, #tpu.memory_space<vmem>>, vector<8x32xf32>
    %1 = arith.truncf %0 : vector<8x32xf32> to vector<8x32xbf16>
    %c0_1 = arith.constant 0 : index
    %c0_2 = arith.constant 0 : index
    %2 = vector.load %arg2[%c0_1, %c0_2] : memref<32x32xbf16, #tpu.memory_space<vmem>>, vector<32x32xbf16>
    %cst = arith.constant dense<0.000000e+00> : vector<8x32xf32>
    %3 = tpu.matmul %1, %2, %cst {dimension_numbers = #tpu.dot_dimension_numbers<[1], [0], [0], [1], [0, 0, 1, 1], [], []>} : vector<8x32xbf16>, vector<32x32xbf16>, vector<8x32xf32> -> vector<8x32xf32>
    %c0_3 = arith.constant 0 : index
    %c0_4 = arith.constant 0 : index
    %4 = vector.load %arg3[%c0_3, %c0_4] : memref<1x32xf32, #tpu.memory_space<vmem>>, vector<1x32xf32>
    %5 = vector.broadcast %4 : vector<1x32xf32> to vector<8x32xf32>
    %6 = arith.addf %3, %5 : vector<8x32xf32>
    %cst_5 = arith.constant 5.000000e-01 : f32
    %7 = vector.broadcast %cst_5 : f32 to vector<8x32xf32>
    %8 = arith.mulf %7, %6 : vector<8x32xf32>
    %cst_6 = arith.constant 0.707106769 : f32
    %9 = vector.broadcast %cst_6 : f32 to vector<8x32xf32>
    %10 = arith.mulf %6, %9 : vector<8x32xf32>
    %11 = math.erf %10 : vector<8x32xf32>
    %cst_7 = arith.constant 1.000000e+00 : f32
    %12 = vector.broadcast %cst_7 : f32 to vector<8x32xf32>
    %13 = arith.addf %12, %11 : vector<8x32xf32>
    %14 = arith.mulf %8, %13 : vector<8x32xf32>
    %cst_8 = arith.constant dense<0.000000e+00> : vector<8xf32>
    %15 = vector.multi_reduction <add>, %14, %cst_8 [1] : vector<8x32xf32> to vector<8xf32>
    %16 = vector.shape_cast %15 : vector<8xf32> to vector<8x1xf32>
    %17 = arith.mulf %14, %14 : vector<8x32xf32>
    %cst_9 = arith.constant dense<0.000000e+00> : vector<8xf32>
    %18 = vector.multi_reduction <add>, %17, %cst_9 [1] : vector<8x32xf32> to vector<8xf32>
    %19 = vector.shape_cast %18 : vector<8xf32> to vector<8x1xf32>
    %cst_10 = arith.constant 3.125000e-02 : f32
    %20 = vector.broadcast %cst_10 : f32 to vector<8x1xf32>
    %21 = arith.mulf %16, %20 : vector<8x1xf32>
    %cst_11 = arith.constant 3.125000e-02 : f32
    %22 = vector.broadcast %cst_11 : f32 to vector<8x1xf32>
    %23 = arith.mulf %19, %22 : vector<8x1xf32>
    %24 = arith.mulf %21, %21 : vector<8x1xf32>
    %25 = arith.subf %23, %24 : vector<8x1xf32>
    %cst_12 = arith.constant 0.000000e+00 : f32
    %26 = vector.broadcast %cst_12 : f32 to vector<8x1xf32>
    %27 = arith.maximumf %25, %26 : vector<8x1xf32>
    %cst_13 = arith.constant 9.99999974E-6 : f32
    %28 = vector.broadcast %cst_13 : f32 to vector<8x1xf32>
    %29 = arith.addf %27, %28 : vector<8x1xf32>
    %30 = math.rsqrt %29 : vector<8x1xf32>
    %31 = vector.broadcast %30 : vector<8x1xf32> to vector<8x32xf32>
    %32 = arith.mulf %14, %31 : vector<8x32xf32>
    %33 = arith.mulf %21, %30 : vector<8x1xf32>
    %34 = vector.broadcast %33 : vector<8x1xf32> to vector<8x32xf32>
    %35 = arith.subf %32, %34 : vector<8x32xf32>
    %36 = arith.truncf %35 : vector<8x32xf32> to vector<8x32xbf16>
    %c0_14 = arith.constant 0 : index
    %c0_15 = arith.constant 0 : index
    %37 = vector.load %arg4[%c0_14, %c0_15] : memref<32x128xbf16, #tpu.memory_space<vmem>>, vector<32x128xbf16>
    %cst_16 = arith.constant dense<0.000000e+00> : vector<8x128xf32>
    %38 = tpu.matmul %36, %37, %cst_16 {dimension_numbers = #tpu.dot_dimension_numbers<[1], [0], [0], [1], [0, 0, 1, 1], [], []>} : vector<8x32xbf16>, vector<32x128xbf16>, vector<8x128xf32> -> vector<8x128xf32>
    %c0_17 = arith.constant 0 : index
    %c0_18 = arith.constant 0 : index
    %39 = vector.load %arg5[%c0_17, %c0_18] : memref<1x128xf32, #tpu.memory_space<vmem>>, vector<1x128xf32>
    %40 = vector.broadcast %39 : vector<1x128xf32> to vector<8x128xf32>
    %41 = arith.addf %38, %40 : vector<8x128xf32>
    %c0_19 = arith.constant 0 : index
    %c0_20 = arith.constant 0 : index
    %42 = vector.load %arg6[%c0_19, %c0_20] : memref<8x128xf32, #tpu.memory_space<vmem>>, vector<8x128xf32>
    tpu.vector_store %arg6[%c0_19, %c0_20], %41 {strides = array<i32>} : memref<8x128xf32, #tpu.memory_space<vmem>>, vector<8x128xf32>,
    return
  }
  func.func @transform_0(%arg0: i32) -> (i32, i32) {
    %c0_i32 = arith.constant 0 : i32
    %c0_i32_0 = arith.constant 0 : i32
    return %arg0, %c0_i32 : i32, i32
  }
  func.func @transform_1(%arg0: i32) -> (i32, i32) {
    %c0_i32 = arith.constant 0 : i32
    %c0_i32_0 = arith.constant 0 : i32
    %c0_i32_1 = arith.constant 0 : i32
    return %c0_i32, %c0_i32_0 : i32, i32
  }
  func.func @transform_2(%arg0: i32) -> (i32, i32) {
    %c0_i32 = arith.constant 0 : i32
    %c0_i32_0 = arith.constant 0 : i32
    %c0_i32_1 = arith.constant 0 : i32
    return %c0_i32, %c0_i32_0 : i32, i32
  }
  func.func @transform_3(%arg0: i32) -> (i32, i32) {
    %c0_i32 = arith.constant 0 : i32
    %c0_i32_0 = arith.constant 0 : i32
    %c0_i32_1 = arith.constant 0 : i32
    return %c0_i32, %c0_i32_0 : i32, i32
  }
  func.func @transform_4(%arg0: i32) -> (i32, i32) {
    %c0_i32 = arith.constant 0 : i32
    %c0_i32_0 = arith.constant 0 : i32
    %c0_i32_1 = arith.constant 0 : i32
    return %c0_i32, %c0_i32_0 : i32, i32
  }
  func.func @transform_5(%arg0: i32) -> (i32, i32) {
    %c0_i32 = arith.constant 0 : i32
    %c0_i32_0 = arith.constant 0 : i32
    return %arg0, %c0_i32 : i32, i32
  }
}

</mosaic_0001>

<llo_original>
// kernel: sequence_profile_head.1
$region0: #{sequence_profile_head.1}
  #allocation0 [shape = 'u32[]', space=smem, size = 0x4, offset = 0x4, fixed_abs, tag = 'smem constant byte address 0x4 - core index']
  #allocation1 [shape = 'u32[144,128]{1,0:T(1,128)}', space=vmem, size = 0x12000, scoped, tag = 'internal scratch']
  %s0 = inlined_call_operand.vmem [shape: f32[16,32], index: 0, kind: input, shape index: {}]
  %s1 = inlined_call_operand.vmem [shape: bf16[32,32], index: 1, kind: input, shape index: {}]
  %s2 = inlined_call_operand.vmem [shape: f32[1,32], index: 2, kind: input, shape index: {}]
  %s3 = inlined_call_operand.vmem [shape: bf16[32,128], index: 3, kind: input, shape index: {}]
  %s4 = inlined_call_operand.vmem [shape: f32[1,128], index: 4, kind: input, shape index: {}]
  %s5 = inlined_call_operand.vmem [shape: f32[16,128], index: 5, kind: output, shape index: {}]
  %s6 = sld [smem:[#allocation0]]
  $region53: #{sequence_profile_head.1} parent=0
    _
  %s8 = ssub.s32 1, %s6
  %s9 = scalar_select 0, %s8, %s6
  loop: start=0, step=1, limit=4
  $region2: #{sequence_profile_head.1} parent=0 // loop_pre_header
    _
  $region3: #{sequence_profile_head.1} parent=0 // loop_header
    %s11 = sphi 0, %s15
    %p12 = scmp.ge.s32.totalorder %s11, 4
    %s21 = sphi 0, %s23
    %s24 = sphi 0, %s21
    %s25 = sphi 0, %s24
    %s41 = sphi 0, %s25
    %s45 = sphi 0, %s45
    %s47 = sphi 0, %s45
    %s48 = sphi 0, %s47
    %s62 = sphi 0, %s48
    %s66 = sphi 0, %s66
    %s68 = sphi 0, %s66
    %s69 = sphi 0, %s68
    %s83 = sphi 0, %s69
    %s87 = sphi 0, %s87
    %s89 = sphi 0, %s87
    %s90 = sphi 0, %s89
    %s104 = sphi 0, %s90
    %s108 = sphi 0, %s108
    %s110 = sphi 0, %s108
    %s111 = sphi 0, %s110
    %s125 = sphi 0, %s111
    %s131 = sphi 0, %s133
    %s134 = sphi 0, %s131
    %s135 = sphi 0, %s134
    %s151 = sphi 0, %s135
  $region4: #{sequence_profile_head.1} parent=0 // loop_header_branch
    %14 = sbr.rel (%p12) target = $region8
  $region5: #{sequence_profile_head.1} parent=0 // loop_body
    %s16 = ssub.s32 %s11, 1
    %s17 = ssub.s32 %s11, 2
    %s18 = sadd.s32 %s11, 1
    %s19 = ssub.s32 %s11, %s18
    %p20 = scmp.eq.s32.totalorder %s19, 0
    %s22 = sadd.s32 %s21, 1
    %s23 = scalar_select %p20, %s21, %s22
    %p26 = pneg %p20
    %p27 = scmp.eq.s32.totalorder %s11, 1
    %p28 = por %p26, %p27
    %p29 = scmp.ne.s32.totalorder %s21, %s24
    %p30 = scmp.eq.s32.totalorder %s11, 0
    %p31 = por %p29, %p30
    %p32 = scmp.ne.s32.totalorder %s21, %s24
    %p33 = scmp.eq.s32.totalorder %s16, 1
    %p34 = por %p32, %p33
    %p35 = scmp.ne.s32.totalorder %s24, %s25
    %p36 = scmp.eq.s32.totalorder %s16, 0
    %p37 = por %p35, %p36
    %p38 = scmp.ne.s32.totalorder %s24, %s25
    %p39 = scmp.eq.s32.totalorder %s17, 1
    %p40 = por %p38, %p39
    %p42 = scmp.ne.s32.totalorder %s25, %s41
    %p43 = scmp.eq.s32.totalorder %s17, 0
    %p44 = por %p42, %p43
    %s46 = sadd.s32 %s45, 1
    %p49 = scmp.eq.s32.totalorder %s11, 1
    %p50 = scmp.ne.s32.totalorder %s45, %s47
    %p51 = scmp.eq.s32.totalorder %s11, 0
    %p52 = por %p50, %p51
    %p53 = scmp.ne.s32.totalorder %s45, %s47
    %p54 = scmp.eq.s32.totalorder %s16, 1
    %p55 = por %p53, %p54
    %p56 = scmp.ne.s32.totalorder %s47, %s48
    %p57 = scmp.eq.s32.totalorder %s16, 0
    %p58 = por %p56, %p57
    %p59 = scmp.ne.s32.totalorder %s47, %s48
    %p60 = scmp.eq.s32.totalorder %s17, 1
    %p61 = por %p59, %p60
    %p63 = scmp.ne.s32.totalorder %s48, %s62
    %p64 = scmp.eq.s32.totalorder %s17, 0
    %p65 = por %p63, %p64
    %s67 = sadd.s32 %s66, 1
    %p70 = scmp.eq.s32.totalorder %s11, 1
    %p71 = scmp.ne.s32.totalorder %s66, %s68
    %p72 = scmp.eq.s32.totalorder %s11, 0
    %p73 = por %p71, %p72
    %p74 = scmp.ne.s32.totalorder %s66, %s68
    %p75 = scmp.eq.s32.totalorder %s16, 1
    %p76 = por %p74, %p75
    %p77 = scmp.ne.s32.totalorder %s68, %s69
    %p78 = scmp.eq.s32.totalorder %s16, 0
    %p79 = por %p77, %p78
    %p80 = scmp.ne.s32.totalorder %s68, %s69
    %p81 = scmp.eq.s32.totalorder %s17, 1
    %p82 = por %p80, %p81
    %p84 = scmp.ne.s32.totalorder %s69, %s83
    %p85 = scmp.eq.s32.totalorder %s17, 0
    %p86 = por %p84, %p85
    %s88 = sadd.s32 %s87, 1
    %p91 = scmp.eq.s32.totalorder %s11, 1
    %p92 = scmp.ne.s32.totalorder %s87, %s89
    %p93 = scmp.eq.s32.totalorder %s11, 0
    %p94 = por %p92, %p93
    %p95 = scmp.ne.s32.totalorder %s87, %s89
    %p96 = scmp.eq.s32.totalorder %s16, 1
    %p97 = por %p95, %p96
    %p98 = scmp.ne.s32.totalorder %s89, %s90
    %p99 = scmp.eq.s32.totalorder %s16, 0
    %p100 = por %p98, %p99
    %p101 = scmp.ne.s32.totalorder %s89, %s90
    %p102 = scmp.eq.s32.totalorder %s17, 1
    %p103 = por %p101, %p102
    %p105 = scmp.ne.s32.totalorder %s90, %s104
    %p106 = scmp.eq.s32.totalorder %s17, 0
    %p107 = por %p105, %p106
    %s109 = sadd.s32 %s108, 1
    %p112 = scmp.eq.s32.totalorder %s11, 1
    %p113 = scmp.ne.s32.totalorder %s108, %s110
    %p114 = scmp.eq.s32.totalorder %s11, 0
    %p115 = por %p113, %p114
    %p116 = scmp.ne.s32.totalorder %s108, %s110
    %p117 = scmp.eq.s32.totalorder %s16, 1
    %p118 = por %p116, %p117
    %p119 = scmp.ne.s32.totalorder %s110, %s111
    %p120 = scmp.eq.s32.totalorder %s16, 0
    %p121 = por %p119, %p120
    %p122 = scmp.ne.s32.totalorder %s110, %s111
    %p123 = scmp.eq.s32.totalorder %s17, 1
    %p124 = por %p122, %p123
    %p126 = scmp.ne.s32.totalorder %s111, %s125
    %p127 = scmp.eq.s32.totalorder %s17, 0
    %p128 = por %p126, %p127
    %s129 = ssub.s32 %s11, %s18
    %p130 = scmp.eq.s32.totalorder %s129, 0
    %s132 = sadd.s32 %s131, 1
    %s133 = scalar_select %p130, %s131, %s132
    %p136 = pneg %p130
    %p137 = scmp.eq.s32.totalorder %s11, 1
    %p138 = por %p136, %p137
    %p139 = scmp.ne.s32.totalorder %s131, %s134
    %p140 = scmp.eq.s32.totalorder %s11, 0
    %p141 = por %p139, %p140
    %p142 = scmp.ne.s32.totalorder %s131, %s134
    %p143 = scmp.eq.s32.totalorder %s16, 1
    %p144 = por %p142, %p143
    %p145 = scmp.ne.s32.totalorder %s134, %s135
    %p146 = scmp.eq.s32.totalorder %s16, 0
    %p147 = por %p145, %p146
    %p148 = scmp.ne.s32.totalorder %s134, %s135
    %p149 = scmp.eq.s32.totalorder %s17, 1
    %p150 = por %p148, %p149
    %p152 = scmp.ne.s32.totalorder %s135, %s151
    %p153 = scmp.eq.s32.totalorder %s17, 0
    %p154 = por %p152, %p153
    %p155 = scmp.le.s32.totalorder 1, %s11
    %p156 = scmp.lt.s32.totalorder %s11, 3
    %p157 = pnand %p155, %p156
    %p158 = pneg %p157
    // Predicated region
    $region9: #{sequence_profile_head.1} parent=5 // pred_check
      _
    $region10: #{sequence_profile_head.1} parent=5 // pred_check_branch
      %160 = sbr.rel (%p157) target = $region12
    $region11: #{sequence_profile_head.1} parent=5 // pred_region
      %s161 = ssub.s32 %s11, 1
      // Predicated region
      $region13: #{sequence_profile_head.1} parent=11 // pred_check
        %p162 = pneg %p58
      $region14: #{sequence_profile_head.1} parent=11 // pred_check_branch
        %164 = sbr.rel (%p162) target = $region16
      $region15: #{sequence_profile_head.1} parent=11 // pred_region
        _
      $region16: #{sequence_profile_head.1} parent=11 // pred_fallthru
        _
      // Predicated region
      $region17: #{sequence_profile_head.1} parent=11 // pred_check
        %p165 = pneg %p79
      $region18: #{sequence_profile_head.1} parent=11 // pred_check_branch
        %167 = sbr.rel (%p165) target = $region20
      $region19: #{sequence_profile_head.1} parent=11 // pred_region
        _
      $region20: #{sequence_profile_head.1} parent=11 // pred_fallthru
        _
      // Predicated region
      $region21: #{sequence_profile_head.1} parent=11 // pred_check
        %p168 = pneg %p100
      $region22: #{sequence_profile_head.1} parent=11 // pred_check_branch
        %170 = sbr.rel (%p168) target = $region24
      $region23: #{sequence_profile_head.1} parent=11 // pred_region
        _
      $region24: #{sequence_profile_head.1} parent=11 // pred_fallthru
        _
      // Predicated region
      $region25: #{sequence_profile_head.1} parent=11 // pred_check
        %p171 = pneg %p121
      $region26: #{sequence_profile_head.1} parent=11 // pred_check_branch
        %173 = sbr.rel (%p171) target = $region28
      $region27: #{sequence_profile_head.1} parent=11 // pred_region
        _
      $region28: #{sequence_profile_head.1} parent=11 // pred_fallthru
        _
    $region12: #{sequence_profile_head.1} parent=5 // pred_fallthru
      _
    %p174 = scmp.lt.s32.totalorder %s11, 2
    // Predicated region
    $region29: #{sequence_profile_head.1} parent=5 // pred_check
      %p175 = pneg %p174
    $region30: #{sequence_profile_head.1} parent=5 // pred_check_branch
      %177 = sbr.rel (%p175) target = $region32
    $region31: #{sequence_profile_head.1} parent=5 // pred_region
      // Predicated region
      $region33: #{sequence_profile_head.1} parent=31 // pred_check
        %p178 = pneg %p31
      $region34: #{sequence_profile_head.1} parent=31 // pred_check_branch
        %180 = sbr.rel (%p178) target = $region36
      $region35: #{sequence_profile_head.1} parent=31 // pred_region
        %p181 = scmp.lt.s32.totalorder %s11, 1
        %s182 = scalar_select %p181, %s11, 1
        %s183 = smul.addr %s182, 8
        %s184 = scalar_lea.vmem %s0, %s183
      $region36: #{sequence_profile_head.1} parent=31 // pred_fallthru
        _
    $region32: #{sequence_profile_head.1} parent=5 // pred_fallthru
      _
    %p185 = scmp.le.s32.totalorder 1, %s11
    %p186 = scmp.lt.s32.totalorder %s11, 3
    %p187 = pnand %p185, %p186
    %p188 = pneg %p187
    // Predicated region
    $region37: #{sequence_profile_head.1} parent=5 // pred_check
      _
    $region38: #{sequence_profile_head.1} parent=5 // pred_check_branch
      %190 = sbr.rel (%p187) target = $region40
    $region39: #{sequence_profile_head.1} parent=5 // pred_region
      %s191 = ssub.s32 %s11, 1
      %p192 = scmp.lt.s32.totalorder %s16, 1
      %s193 = scalar_select %p192, %s16, 1
      %s194 = smul.addr %s193, 8
      %s195 = scalar_lea.vmem %s0, %s194
      %p196 = pneg %p37
      %p197 = pneg %p34
      %p198 = pneg %p58
      %p199 = pneg %p55
      %p200 = pneg %p79
      %p201 = pneg %p76
      %p202 = pneg %p100
      %p203 = pneg %p97
      %p204 = pneg %p121
      %p205 = pneg %p118
      %p206 = pneg %p147
      %p207 = pneg %p144
      %p208 = scmp.lt.s32.totalorder %s16, 1
      %s209 = scalar_select %p208, %s16, 1
      %s210 = smul.addr %s209, 8
      %s211 = scalar_lea.vmem %s5, %s210
      %p212 = scmp.lt.s32.totalorder %s16, 1
      %s213 = scalar_select %p212, %s16, 1
      %s214 = smul.addr %s213, 8
      %s215 = scalar_lea.vmem %s0, %s214
      %p216 = scmp.lt.s32.totalorder %s16, 1
      %s217 = scalar_select %p216, %s16, 1
      %s218 = smul.addr %s217, 8
      %s219 = scalar_lea.vmem %s5, %s218
      %v221 = vld [vmem:[%s215] sm:$0xff]
      %v222 = vpack.c.bf16 %v221, %v221
      %v223 = vld [vmem:[%s1] sm:$0xf]
      %v224 = vld [vmem:[%s1 + $0x4] sm:$0xf]
      %v225 = vld [vmem:[%s1 + $0x8] sm:$0xf]
      %v226 = vld [vmem:[%s1 + $0xc] sm:$0xf]
      %v227 = vld [vmem:[%s2] sm:$0x1]
      %v229 = vlaneseq
      %v230 = vshrl.u32 %v229, 7
      %v231 = vsub.s32 0, %v230
      %v232 = vrot.slane %v227, %v231
      %v238 = vunpack.c.l.b16 %v223
      %v239 = vunpack.c.l.b16 %v224
      %v240 = vunpack.c.l.b16 %v225
      %v241 = vunpack.c.l.b16 %v226
      %v242 = vpack.c.b16 %v239, %v238
      %v243 = vpack.c.b16 %v241, %v240
      %vm246 = vcmask 261120
      %v248 = vsel %vm246, %v222, 0
      %250 = vmatprep.subr.bf16.mxu0 0
      %251 = vmatpush1.bf16.msra.mxu0 0
      %252 = vmatprep.subr.bf16.mxu0 0
      %253 = vmatpush1.bf16.msra.mxu0 0
      %254 = vmatprep.subr.bf16.mxu0 0
      %255 = vmatpush1.bf16.msra.mxu0 0
      %256 = vmatprep.subr.bf16.mxu0 0
      %257 = vmatpush1.bf16.msra.mxu0 0
      %258 = vmatprep.subr.bf16.mxu0 0
      %259 = vmatpush1.bf16.msra.mxu0 0
      %260 = vmatprep.subr.bf16.mxu0 0
      %261 = vmatpush1.bf16.msra.mxu0 0
      %262 = vmatprep.subr.bf16.mxu0 0
      %263 = vmatpush1.bf16.msra.mxu0 %v243
      %264 = vmatprep.subr.bf16.mxu0 0
      %265 = vmatpush1.bf16.msra.mxu0 %v242
      %266 = vmatprep.subr.bf16.mxu0 0
      %267 = vmatpush2.bf16.msra.mxu0 0
      %268 = vmatprep.subr.bf16.mxu0 0
      %269 = vmatpush2.bf16.msra.mxu0 0
      %270 = vmatprep.subr.bf16.mxu0 0
      %271 = vmatpush2.bf16.msra.mxu0 0
      %272 = vmatprep.subr.bf16.mxu0 0
      %273 = vmatpush2.bf16.msra.mxu0 0
      %274 = vmatprep.subr.bf16.mxu0 0
      %275 = vmatpush2.bf16.msra.mxu0 0
      %276 = vmatprep.subr.bf16.mxu0 0
      %277 = vmatpush2.bf16.msra.mxu0 0
      %278 = vmatprep.subr.bf16.mxu0 0
      %279 = vmatpush2.bf16.msra.mxu0 0
      %280 = vmatprep.subr.bf16.mxu0 0
      %281 = vmatpush2.bf16.msra.mxu0 0
      %282 = vmatprep.mubr.bf16.mxu0 0
      %283 = vmatmul.mubr.bf16.gmra.mxu0 %v248
      %v284 = vpop.f32.mrf.mxu0
      %v285 = vadd.f32 %v232, %v284
      %v286 = vpop.f32.mrf.mxu0
      %v287 = vpop.f32.mrf.mxu0
      %v288 = vpop.f32.mrf.mxu0
      %289 = vdwg.mxu0
      %v290 = vmul.f32 %v285, 0.5
      %v291 = vmul.f32 %v285, 0.70710677
      %v292 = verf.f32.pop %v291
      %v293 = vadd.f32 %v292, 1.0
      %v294 = vmul.f32 %v290, %v293
      %v295 = vsel %vm246, %v294, 0.0
      %296 = vadd.xlane.f32.xlu0 %v295
      %v297 = vpop.xlane.xlu0 %296
      %v298 = vmul.f32 %v294, %v294
      %v299 = vsel %vm246, %v298, 0.0
      %300 = vadd.xlane.f32.xlu0 %v299
      %v301 = vpop.xlane.xlu0 %300
      %v302 = vmul.f32 %v297, 0.03125
      %v303 = vmul.f32 %v301, 0.03125
      %v304 = vmul.f32 %v302, %v302
      %v305 = vsub.f32 %v303, %v304
      %v306 = vmax.f32 %v305, 0.0
      %v307 = vadd.f32 %v306, 1e-05
      %v308 = vrsqrt.pop %v307
      %v309 = vmul.f32 %v294, %v308
      %v310 = vmul.f32 %v302, %v308
      %v311 = vsub.f32 %v309, %v310
      %v312 = vpack.c.bf16 %v311, %v311
      %v313 = vld [vmem:[%s3] sm:$0xf]
      %v314 = vld [vmem:[%s3 + $0x4] sm:$0xf]
      %v315 = vld [vmem:[%s3 + $0x8] sm:$0xf]
      %v316 = vld [vmem:[%s3 + $0xc] sm:$0xf]
      %v317 = vld [vmem:[%s4] sm:$0x1]
      %v319 = vlaneseq
      %v320 = vshrl.u32 %v319, 7
      %v321 = vsub.s32 0, %v320
      %v322 = vrot.slane %v317, %v321
      %v328 = vunpack.c.l.b16 %v313
      %v329 = vunpack.c.l.b16 %v314
      %v330 = vunpack.c.l.b16 %v315
      %v331 = vunpack.c.l.b16 %v316
      %v332 = vpack.c.b16 %v329, %v328
      %v333 = vpack.c.b16 %v331, %v330
      %v337 = vsel %vm246, %v312, 0
      %339 = vmatprep.subr.bf16.mxu0 0
      %340 = vmatpush1.bf16.msra.mxu0 0
      %341 = vmatprep.subr.bf16.mxu0 0
      %342 = vmatpush1.bf16.msra.mxu0 0
      %343 = vmatprep.subr.bf16.mxu0 0
      %344 = vmatpush1.bf16.msra.mxu0 0
      %345 = vmatprep.subr.bf16.mxu0 0
      %346 = vmatpush1.bf16.msra.mxu0 0
      %347 = vmatprep.subr.bf16.mxu0 0
      %348 = vmatpush1.bf16.msra.mxu0 0
      %349 = vmatprep.subr.bf16.mxu0 0
      %350 = vmatpush1.bf16.msra.mxu0 0
      %351 = vmatprep.subr.bf16.mxu0 0
      %352 = vmatpush1.bf16.msra.mxu0 %v333
      %353 = vmatprep.subr.bf16.mxu0 0
      %354 = vmatpush1.bf16.msra.mxu0 %v332
      %355 = vmatprep.subr.bf16.mxu0 0
      %356 = vmatpush2.bf16.msra.mxu0 0
      %357 = vmatprep.subr.bf16.mxu0 0
      %358 = vmatpush2.bf16.msra.mxu0 0
      %359 = vmatprep.subr.bf16.mxu0 0
      %360 = vmatpush2.bf16.msra.mxu0 0
      %361 = vmatprep.subr.bf16.mxu0 0
      %362 = vmatpush2.bf16.msra.mxu0 0
      %363 = vmatprep.subr.bf16.mxu0 0
      %364 = vmatpush2.bf16.msra.mxu0 0
      %365 = vmatprep.subr.bf16.mxu0 0
      %366 = vmatpush2.bf16.msra.mxu0 0
      %367 = vmatprep.subr.bf16.mxu0 0
      %368 = vmatpush2.bf16.msra.mxu0 0
      %369 = vmatprep.subr.bf16.mxu0 0
      %370 = vmatpush2.bf16.msra.mxu0 0
      %371 = vmatprep.mubr.bf16.mxu0 0
      %372 = vmatmul.mubr.bf16.gmra.mxu0 %v337
      %v373 = vpop.f32.mrf.mxu0
      %v374 = vadd.f32 %v322, %v373
      %v375 = vpop.f32.mrf.mxu0
      %v376 = vpop.f32.mrf.mxu0
      %v377 = vpop.f32.mrf.mxu0
      %378 = vdwg.mxu0
      %379 = vst [vmem:[%s219] sm:$0xff] %v374
      %p380 = scmp.lt.s32.totalorder %s16, 1
      %s381 = scalar_select %p380, %s16, 1
      %s382 = smul.addr %s381, 8
      %s383 = scalar_lea.vmem %s5, %s382
      // Predicated region
      $region41: #{sequence_profile_head.1} parent=39 // pred_check
        %p384 = pneg %p144
      $region42: #{sequence_profile_head.1} parent=39 // pred_check_branch
        %386 = sbr.rel (%p384) target = $region44
      $region43: #{sequence_profile_head.1} parent=39 // pred_region
        _
      $region44: #{sequence_profile_head.1} parent=39 // pred_fallthru
        _
    $region40: #{sequence_profile_head.1} parent=5 // pred_fallthru
      _
    %p387 = scmp.le.s32.totalorder 2, %s11
    // Predicated region
    $region45: #{sequence_profile_head.1} parent=5 // pred_check
      %p388 = pneg %p387
    $region46: #{sequence_profile_head.1} parent=5 // pred_check_branch
      %390 = sbr.rel (%p388) target = $region48
    $region47: #{sequence_profile_head.1} parent=5 // pred_region
      %s391 = ssub.s32 %s11, 2
      // Predicated region
      $region49: #{sequence_profile_head.1} parent=47 // pred_check
        %p392 = pneg %p150
      $region50: #{sequence_profile_head.1} parent=47 // pred_check_branch
        %394 = sbr.rel (%p392) target = $region52
      $region51: #{sequence_profile_head.1} parent=47 // pred_region
        %p395 = scmp.lt.s32.totalorder %s17, 1
        %s396 = scalar_select %p395, %s17, 1
        %s397 = smul.addr %s396, 8
        %s398 = scalar_lea.vmem %s5, %s397
      $region52: #{sequence_profile_head.1} parent=47 // pred_fallthru
        _
    $region48: #{sequence_profile_head.1} parent=5 // pred_fallthru
      _
  $region6: #{sequence_profile_head.1} parent=0 // loop_footer
    %s15 = sadd.s32 1, %s11
  $region7: #{sequence_profile_head.1} parent=0 // loop_footer_branch
    %10 = sbr.rel target = $region3
  $region8: #{sequence_profile_head.1} parent=0 // loop_exit
    _

// kernel: sequence_profile_head.1
$region0: #{sequence_profile_head.1}
  #allocation0 [shape = 'u32[]', space=smem, size = 0x4, offset = 0x4, fixed_abs, tag = 'smem constant byte address 0x4 - core index']
  #allocation1 [shape = 'u32[144,128]{1,0:T(1,128)}', space=vmem, size = 0x12000, scoped, tag = 'internal scratch']
  %s0 = inlined_call_operand.vmem [shape: f32[16,32], index: 0, kind: input, shape index: {}]
  %s1 = inlined_call_operand.vmem [shape: bf16[32,32], index: 1, kind: input, shape index: {}]
  %s2 = inlined_call_operand.vmem [shape: f32[1,32], index: 2, kind: input, shape index: {}]
  %s3 = inlined_call_operand.vmem [shape: bf16[32,128], index: 3, kind: input, shape index: {}]
  %s4 = inlined_call_operand.vmem [shape: f32[1,128], index: 4, kind: input, shape index: {}]
  %s5 = inlined_call_operand.vmem [shape: f32[16,128], index: 5, kind: output, shape index: {}]
  %s6 = sld [smem:[#allocation0]]
  $region53: #{sequence_profile_head.1} parent=0
    _
  %s8 = ssub.s32 1, %s6
  %s9 = scalar_select 0, %s8, %s6
  loop: start=0, step=1, limit=4
  $region2: #{sequence_profile_head.1} parent=0 // loop_pre_header
    _
  $region3: #{sequence_profile_head.1} parent=0 // loop_header
    %s11 = sphi 0, %s15
    %p12 = scmp.ge.s32.totalorder %s11, 4
    %s21 = sphi 0, %s23
    %s24 = sphi 0, %s21
    %s25 = sphi 0, %s24
    %s41 = sphi 0, %s25
    %s45 = sphi 0, %s45
    %s47 = sphi 0, %s45
    %s48 = sphi 0, %s47
    %s62 = sphi 0, %s48
    %s66 = sphi 0, %s66
    %s68 = sphi 0, %s66
    %s69 = sphi 0, %s68
    %s83 = sphi 0, %s69
    %s87 = sphi 0, %s87
    %s89 = sphi 0, %s87
    %s90 = sphi 0, %s89
    %s104 = sphi 0, %s90
    %s108 = sphi 0, %s108
    %s110 = sphi 0, %s108
    %s111 = sphi 0, %s110
    %s125 = sphi 0, %s111
    %s131 = sphi 0, %s133
    %s134 = sphi 0, %s131
    %s135 = sphi 0, %s134
    %s151 = sphi 0, %s135
  $region4: #{sequence_profile_head.1} parent=0 // loop_header_branch
    %14 = sbr.rel (%p12) target = $region8
  $region5: #{sequence_profile_head.1} parent=0 // loop_body
    %s16 = ssub.s32 %s11, 1
    %s17 = ssub.s32 %s11, 2
    %s18 = sadd.s32 %s11, 1
    %s19 = ssub.s32 %s11, %s18
    %p20 = scmp.eq.s32.totalorder %s19, 0
    %s22 = sadd.s32 %s21, 1
    %s23 = scalar_select %p20, %s21, %s22
    %p26 = pneg %p20
    %p27 = scmp.eq.s32.totalorder %s11, 1
    %p28 = por %p26, %p27
    %p29 = scmp.ne.s32.totalorder %s21, %s24
    %p30 = scmp.eq.s32.totalorder %s11, 0
    %p31 = por %p29, %p30
    %p32 = scmp.ne.s32.totalorder %s21, %s24
    %p33 = scmp.eq.s32.totalorder %s16, 1
    %p34 = por %p32, %p33
    %p35 = scmp.ne.s32.totalorder %s24, %s25
    %p36 = scmp.eq.s32.totalorder %s16, 0
    %p37 = por %p35, %p36
    %p38 = scmp.ne.s32.totalorder %s24, %s25
    %p39 = scmp.eq.s32.totalorder %s17, 1
    %p40 = por %p38, %p39
    %p42 = scmp.ne.s32.totalorder %s25, %s41
    %p43 = scmp.eq.s32.totalorder %s17, 0
    %p44 = por %p42, %p43
    %s46 = sadd.s32 %s45, 1
    %p49 = scmp.eq.s32.totalorder %s11, 1
    %p50 = scmp.ne.s32.totalorder %s45, %s47
    %p51 = scmp.eq.s32.totalorder %s11, 0
    %p52 = por %p50, %p51
    %p53 = scmp.ne.s32.totalorder %s45, %s47
    %p54 = scmp.eq.s32.totalorder %s16, 1
    %p55 = por %p53, %p54
    %p56 = scmp.ne.s32.totalorder %s47, %s48
    %p57 = scmp.eq.s32.totalorder %s16, 0
    %p58 = por %p56, %p57
    %p59 = scmp.ne.s32.totalorder %s47, %s48
    %p60 = scmp.eq.s32.totalorder %s17, 1
    %p61 = por %p59, %p60
    %p63 = scmp.ne.s32.totalorder %s48, %s62
    %p64 = scmp.eq.s32.totalorder %s17, 0
    %p65 = por %p63, %p64
    %s67 = sadd.s32 %s66, 1
    %p70 = scmp.eq.s32.totalorder %s11, 1
    %p71 = scmp.ne.s32.totalorder %s66, %s68
    %p72 = scmp.eq.s32.totalorder %s11, 0
    %p73 = por %p71, %p72
    %p74 = scmp.ne.s32.totalorder %s66, %s68
    %p75 = scmp.eq.s32.totalorder %s16, 1
    %p76 = por %p74, %p75
    %p77 = scmp.ne.s32.totalorder %s68, %s69
    %p78 = scmp.eq.s32.totalorder %s16, 0
    %p79 = por %p77, %p78
    %p80 = scmp.ne.s32.totalorder %s68, %s69
    %p81 = scmp.eq.s32.totalorder %s17, 1
    %p82 = por %p80, %p81
    %p84 = scmp.ne.s32.totalorder %s69, %s83
    %p85 = scmp.eq.s32.totalorder %s17, 0
    %p86 = por %p84, %p85
    %s88 = sadd.s32 %s87, 1
    %p91 = scmp.eq.s32.totalorder %s11, 1
    %p92 = scmp.ne.s32.totalorder %s87, %s89
    %p93 = scmp.eq.s32.totalorder %s11, 0
    %p94 = por %p92, %p93
    %p95 = scmp.ne.s32.totalorder %s87, %s89
    %p96 = scmp.eq.s32.totalorder %s16, 1
    %p97 = por %p95, %p96
    %p98 = scmp.ne.s32.totalorder %s89, %s90
    %p99 = scmp.eq.s32.totalorder %s16, 0
    %p100 = por %p98, %p99
    %p101 = scmp.ne.s32.totalorder %s89, %s90
    %p102 = scmp.eq.s32.totalorder %s17, 1
    %p103 = por %p101, %p102
    %p105 = scmp.ne.s32.totalorder %s90, %s104
    %p106 = scmp.eq.s32.totalorder %s17, 0
    %p107 = por %p105, %p106
    %s109 = sadd.s32 %s108, 1
    %p112 = scmp.eq.s32.totalorder %s11, 1
    %p113 = scmp.ne.s32.totalorder %s108, %s110
    %p114 = scmp.eq.s32.totalorder %s11, 0
    %p115 = por %p113, %p114
    %p116 = scmp.ne.s32.totalorder %s108, %s110
    %p117 = scmp.eq.s32.totalorder %s16, 1
    %p118 = por %p116, %p117
    %p119 = scmp.ne.s32.totalorder %s110, %s111
    %p120 = scmp.eq.s32.totalorder %s16, 0
    %p121 = por %p119, %p120
    %p122 = scmp.ne.s32.totalorder %s110, %s111
    %p123 = scmp.eq.s32.totalorder %s17, 1
    %p124 = por %p122, %p123
    %p126 = scmp.ne.s32.totalorder %s111, %s125
    %p127 = scmp.eq.s32.totalorder %s17, 0
    %p128 = por %p126, %p127
    %s129 = ssub.s32 %s11, %s18
    %p130 = scmp.eq.s32.totalorder %s129, 0
    %s132 = sadd.s32 %s131, 1
    %s133 = scalar_select %p130, %s131, %s132
    %p136 = pneg %p130
    %p137 = scmp.eq.s32.totalorder %s11, 1
    %p138 = por %p136, %p137
    %p139 = scmp.ne.s32.totalorder %s131, %s134
    %p140 = scmp.eq.s32.totalorder %s11, 0
    %p141 = por %p139, %p140
    %p142 = scmp.ne.s32.totalorder %s131, %s134
    %p143 = scmp.eq.s32.totalorder %s16, 1
    %p144 = por %p142, %p143
    %p145 = scmp.ne.s32.totalorder %s134, %s135
    %p146 = scmp.eq.s32.totalorder %s16, 0
    %p147 = por %p145, %p146
    %p148 = scmp.ne.s32.totalorder %s134, %s135
    %p149 = scmp.eq.s32.totalorder %s17, 1
    %p150 = por %p148, %p149
    %p152 = scmp.ne.s32.totalorder %s135, %s151
    %p153 = scmp.eq.s32.totalorder %s17, 0
    %p154 = por %p152, %p153
    %p155 = scmp.le.s32.totalorder 1, %s11
    %p156 = scmp.lt.s32.totalorder %s11, 3
    %p157 = pnand %p155, %p156
    %p158 = pneg %p157
    // Predicated region
    $region9: #{sequence_profile_head.1} parent=5 // pred_check
      _
    $region10: #{sequence_profile_head.1} parent=5 // pred_check_branch
      %160 = sbr.rel (%p157) target = $region12
    $region11: #{sequence_profile_head.1} parent=5 // pred_region
      %s161 = ssub.s32 %s11, 1
      // Predicated region
      $region13: #{sequence_profile_head.1} parent=11 // pred_check
        %p162 = pneg %p58
      $region14: #{sequence_profile_head.1} parent=11 // pred_check_branch
        %164 = sbr.rel (%p162) target = $region16
      $region15: #{sequence_profile_head.1} parent=11 // pred_region
        _
      $region16: #{sequence_profile_head.1} parent=11 // pred_fallthru
        _
      // Predicated region
      $region17: #{sequence_profile_head.1} parent=11 // pred_check
        %p165 = pneg %p79
      $region18: #{sequence_profile_head.1} parent=11 // pred_check_branch
        %167 = sbr.rel (%p165) target = $region20
      $region19: #{sequence_profile_head.1} parent=11 // pred_region
        _
      $region20: #{sequence_profile_head.1} parent=11 // pred_fallthru
        _
      // Predicated region
      $region21: #{sequence_profile_head.1} parent=11 // pred_check
        %p168 = pneg %p100
      $region22: #{sequence_profile_head.1} parent=11 // pred_check_branch
        %170 = sbr.rel (%p168) target = $region24
      $region23: #{sequence_profile_head.1} parent=11 // pred_region
        _
      $region24: #{sequence_profile_head.1} parent=11 // pred_fallthru
        _
      // Predicated region
      $region25: #{sequence_profile_head.1} parent=11 // pred_check
        %p171 = pneg %p121
      $region26: #{sequence_profile_head.1} parent=11 // pred_check_branch
        %173 = sbr.rel (%p171) target = $region28
      $region27: #{sequence_profile_head.1} parent=11 // pred_region
        _
      $region28: #{sequence_profile_head.1} parent=11 // pred_fallthru
        _
    $region12: #{sequence_profile_head.1} parent=5 // pred_fallthru
      _
    %p174 = scmp.lt.s32.totalorder %s11, 2
    // Predicated region
    $region29: #{sequence_profile_head.1} parent=5 // pred_check
      %p175 = pneg %p174
    $region30: #{sequence_profile_head.1} parent=5 // pred_check_branch
      %177 = sbr.rel (%p175) target = $region32
    $region31: #{sequence_profile_head.1} parent=5 // pred_region
      // Predicated region
      $region33: #{sequence_profile_head.1} parent=31 // pred_check
        %p178 = pneg %p31
      $region34: #{sequence_profile_head.1} parent=31 // pred_check_branch
        %180 = sbr.rel (%p178) target = $region36
      $region35: #{sequence_profile_head.1} parent=31 // pred_region
        %p181 = scmp.lt.s32.totalorder %s11, 1
        %s182 = scalar_select %p181, %s11, 1
        %s183 = smul.addr %s182, 8
        %s184 = scalar_lea.vmem %s0, %s183
      $region36: #{sequence_profile_head.1} parent=31 // pred_fallthru
        _
    $region32: #{sequence_profile_head.1} parent=5 // pred_fallthru
      _
    %p185 = scmp.le.s32.totalorder 1, %s11
    %p186 = scmp.lt.s32.totalorder %s11, 3
    %p187 = pnand %p185, %p186
    %p188 = pneg %p187
    // Predicated region
    $region37: #{sequence_profile_head.1} parent=5 // pred_check
      _
    $region38: #{sequence_profile_head.1} parent=5 // pred_check_branch
      %190 = sbr.rel (%p187) target = $region40
    $region39: #{sequence_profile_head.1} parent=5 // pred_region
      %s191 = ssub.s32 %s11, 1
      %p192 = scmp.lt.s32.totalorder %s16, 1
      %s193 = scalar_select %p192, %s16, 1
      %s194 = smul.addr %s193, 8
      %s195 = scalar_lea.vmem %s0, %s194
      %p196 = pneg %p37
      %p197 = pneg %p34
      %p198 = pneg %p58
      %p199 = pneg %p55
      %p200 = pneg %p79
      %p201 = pneg %p76
      %p202 = pneg %p100
      %p203 = pneg %p97
      %p204 = pneg %p121
      %p205 = pneg %p118
      %p206 = pneg %p147
      %p207 = pneg %p144
      %p208 = scmp.lt.s32.totalorder %s16, 1
      %s209 = scalar_select %p208, %s16, 1
      %s210 = smul.addr %s209, 8
      %s211 = scalar_lea.vmem %s5, %s210
      %p212 = scmp.lt.s32.totalorder %s16, 1
      %s213 = scalar_select %p212, %s16, 1
      %s214 = smul.addr %s213, 8
      %s215 = scalar_lea.vmem %s0, %s214
      %p216 = scmp.lt.s32.totalorder %s16, 1
      %s217 = scalar_select %p216, %s16, 1
      %s218 = smul.addr %s217, 8
      %s219 = scalar_lea.vmem %s5, %s218
      %v221 = vld [vmem:[%s215] sm:$0xff]
      %v222 = vpack.c.bf16 %v221, %v221
      %v223 = vld [vmem:[%s1] sm:$0xf]
      %v224 = vld [vmem:[%s1 + $0x4] sm:$0xf]
      %v225 = vld [vmem:[%s1 + $0x8] sm:$0xf]
      %v226 = vld [vmem:[%s1 + $0xc] sm:$0xf]
      %v227 = vld [vmem:[%s2] sm:$0x1]
      %v229 = vlaneseq
      %v230 = vshrl.u32 %v229, 7
      %v231 = vsub.s32 0, %v230
      %v232 = vrot.slane %v227, %v231
      %v238 = vunpack.c.l.b16 %v223
      %v239 = vunpack.c.l.b16 %v224
      %v240 = vunpack.c.l.b16 %v225
      %v241 = vunpack.c.l.b16 %v226
      %v242 = vpack.c.b16 %v239, %v238
      %v243 = vpack.c.b16 %v241, %v240
      %vm246 = vcmask 261120
      %v248 = vsel %vm246, %v222, 0
      %250 = vmatprep.subr.bf16.mxu0 0
      %251 = vmatpush1.bf16.msra.mxu0 0
      %252 = vmatprep.subr.bf16.mxu0 0
      %253 = vmatpush1.bf16.msra.mxu0 0
      %254 = vmatprep.subr.bf16.mxu0 0
      %255 = vmatpush1.bf16.msra.mxu0 0
      %256 = vmatprep.subr.bf16.mxu0 0
      %257 = vmatpush1.bf16.msra.mxu0 0
      %258 = vmatprep.subr.bf16.mxu0 0
      %259 = vmatpush1.bf16.msra.mxu0 0
      %260 = vmatprep.subr.bf16.mxu0 0
      %261 = vmatpush1.bf16.msra.mxu0 0
      %262 = vmatprep.subr.bf16.mxu0 0
      %263 = vmatpush1.bf16.msra.mxu0 %v243
      %264 = vmatprep.subr.bf16.mxu0 0
      %265 = vmatpush1.bf16.msra.mxu0 %v242
      %266 = vmatprep.subr.bf16.mxu0 0
      %267 = vmatpush2.bf16.msra.mxu0 0
      %268 = vmatprep.subr.bf16.mxu0 0
      %269 = vmatpush2.bf16.msra.mxu0 0
      %270 = vmatprep.subr.bf16.mxu0 0
      %271 = vmatpush2.bf16.msra.mxu0 0
      %272 = vmatprep.subr.bf16.mxu0 0
      %273 = vmatpush2.bf16.msra.mxu0 0
      %274 = vmatprep.subr.bf16.mxu0 0
      %275 = vmatpush2.bf16.msra.mxu0 0
      %276 = vmatprep.subr.bf16.mxu0 0
      %277 = vmatpush2.bf16.msra.mxu0 0
      %278 = vmatprep.subr.bf16.mxu0 0
      %279 = vmatpush2.bf16.msra.mxu0 0
      %280 = vmatprep.subr.bf16.mxu0 0
      %281 = vmatpush2.bf16.msra.mxu0 0
      %282 = vmatprep.mubr.bf16.mxu0 0
      %283 = vmatmul.mubr.bf16.gmra.mxu0 %v248
      %v284 = vpop.f32.mrf.mxu0
      %v285 = vadd.f32 %v232, %v284
      %v286 = vpop.f32.mrf.mxu0
      %v287 = vpop.f32.mrf.mxu0
      %v288 = vpop.f32.mrf.mxu0
      %289 = vdwg.mxu0
      %v290 = vmul.f32 %v285, 0.5
      %v291 = vmul.f32 %v285, 0.70710677
      %v292 = verf.f32.pop %v291
      %v293 = vadd.f32 %v292, 1.0
      %v294 = vmul.f32 %v290, %v293
      %v295 = vsel %vm246, %v294, 0.0
      %296 = vadd.xlane.f32.xlu0 %v295
      %v297 = vpop.xlane.xlu0 %296
      %v298 = vmul.f32 %v294, %v294
      %v299 = vsel %vm246, %v298, 0.0
      %300 = vadd.xlane.f32.xlu0 %v299
      %v301 = vpop.xlane.xlu0 %300
      %v302 = vmul.f32 %v297, 0.03125
      %v303 = vmul.f32 %v301, 0.03125
      %v304 = vmul.f32 %v302, %v302
      %v305 = vsub.f32 %v303, %v304
      %v306 = vmax.f32 %v305, 0.0
      %v307 = vadd.f32 %v306, 1e-05
      %v308 = vrsqrt.pop %v307
      %v309 = vmul.f32 %v294, %v308
      %v310 = vmul.f32 %v302, %v308
      %v311 = vsub.f32 %v309, %v310
      %v312 = vpack.c.bf16 %v311, %v311
      %v313 = vld [vmem:[%s3] sm:$0xf]
      %v314 = vld [vmem:[%s3 + $0x4] sm:$0xf]
      %v315 = vld [vmem:[%s3 + $0x8] sm:$0xf]
      %v316 = vld [vmem:[%s3 + $0xc] sm:$0xf]
      %v317 = vld [vmem:[%s4] sm:$0x1]
      %v319 = vlaneseq
      %v320 = vshrl.u32 %v319, 7
      %v321 = vsub.s32 0, %v320
      %v322 = vrot.slane %v317, %v321
      %v328 = vunpack.c.l.b16 %v313
      %v329 = vunpack.c.l.b16 %v314
      %v330 = vunpack.c.l.b16 %v315
      %v331 = vunpack.c.l.b16 %v316
      %v332 = vpack.c.b16 %v329, %v328
      %v333 = vpack.c.b16 %v331, %v330
      %v337 = vsel %vm246, %v312, 0
      %339 = vmatprep.subr.bf16.mxu0 0
      %340 = vmatpush1.bf16.msra.mxu0 0
      %341 = vmatprep.subr.bf16.mxu0 0
      %342 = vmatpush1.bf16.msra.mxu0 0
      %343 = vmatprep.subr.bf16.mxu0 0
      %344 = vmatpush1.bf16.msra.mxu0 0
      %345 = vmatprep.subr.bf16.mxu0 0
      %346 = vmatpush1.bf16.msra.mxu0 0
      %347 = vmatprep.subr.bf16.mxu0 0
      %348 = vmatpush1.bf16.msra.mxu0 0
      %349 = vmatprep.subr.bf16.mxu0 0
      %350 = vmatpush1.bf16.msra.mxu0 0
      %351 = vmatprep.subr.bf16.mxu0 0
      %352 = vmatpush1.bf16.msra.mxu0 %v333
      %353 = vmatprep.subr.bf16.mxu0 0
      %354 = vmatpush1.bf16.msra.mxu0 %v332
      %355 = vmatprep.subr.bf16.mxu0 0
      %356 = vmatpush2.bf16.msra.mxu0 0
      %357 = vmatprep.subr.bf16.mxu0 0
      %358 = vmatpush2.bf16.msra.mxu0 0
      %359 = vmatprep.subr.bf16.mxu0 0
      %360 = vmatpush2.bf16.msra.mxu0 0
      %361 = vmatprep.subr.bf16.mxu0 0
      %362 = vmatpush2.bf16.msra.mxu0 0
      %363 = vmatprep.subr.bf16.mxu0 0
      %364 = vmatpush2.bf16.msra.mxu0 0
      %365 = vmatprep.subr.bf16.mxu0 0
      %366 = vmatpush2.bf16.msra.mxu0 0
      %367 = vmatprep.subr.bf16.mxu0 0
      %368 = vmatpush2.bf16.msra.mxu0 0
      %369 = vmatprep.subr.bf16.mxu0 0
      %370 = vmatpush2.bf16.msra.mxu0 0
      %371 = vmatprep.mubr.bf16.mxu0 0
      %372 = vmatmul.mubr.bf16.gmra.mxu0 %v337
      %v373 = vpop.f32.mrf.mxu0
      %v374 = vadd.f32 %v322, %v373
      %v375 = vpop.f32.mrf.mxu0
      %v376 = vpop.f32.mrf.mxu0
      %v377 = vpop.f32.mrf.mxu0
      %378 = vdwg.mxu0
      %379 = vst [vmem:[%s219] sm:$0xff] %v374
      %p380 = scmp.lt.s32.totalorder %s16, 1
      %s381 = scalar_select %p380, %s16, 1
      %s382 = smul.addr %s381, 8
      %s383 = scalar_lea.vmem %s5, %s382
      // Predicated region
      $region41: #{sequence_profile_head.1} parent=39 // pred_check
        %p384 = pneg %p144
      $region42: #{sequence_profile_head.1} parent=39 // pred_check_branch
        %386 = sbr.rel (%p384) target = $region44
      $region43: #{sequence_profile_head.1} parent=39 // pred_region
        _
      $region44: #{sequence_profile_head.1} parent=39 // pred_fallthru
        _
    $region40: #{sequence_profile_head.1} parent=5 // pred_fallthru
      _
    %p387 = scmp.le.s32.totalorder 2, %s11
    // Predicated region
    $region45: #{sequence_profile_head.1} parent=5 // pred_check
      %p388 = pneg %p387
    $region46: #{sequence_profile_head.1} parent=5 // pred_check_branch
      %390 = sbr.rel (%p388) target = $region48
    $region47: #{sequence_profile_head.1} parent=5 // pred_region
      %s391 = ssub.s32 %s11, 2
      // Predicated region
      $region49: #{sequence_profile_head.1} parent=47 // pred_check
        %p392 = pneg %p150
      $region50: #{sequence_profile_head.1} parent=47 // pred_check_branch
        %394 = sbr.rel (%p392) target = $region52
      $region51: #{sequence_profile_head.1} parent=47 // pred_region
        %p395 = scmp.lt.s32.totalorder %s17, 1
        %s396 = scalar_select %p395, %s17, 1
        %s397 = smul.addr %s396, 8
        %s398 = scalar_lea.vmem %s5, %s397
      $region52: #{sequence_profile_head.1} parent=47 // pred_fallthru
        _
    $region48: #{sequence_profile_head.1} parent=5 // pred_fallthru
      _
  $region6: #{sequence_profile_head.1} parent=0 // loop_footer
    %s15 = sadd.s32 1, %s11
  $region7: #{sequence_profile_head.1} parent=0 // loop_footer_branch
    %10 = sbr.rel target = $region3
  $region8: #{sequence_profile_head.1} parent=0 // loop_exit
    _

</llo_original>
